<compile_context>
chip_gen: v7x
topology: tpu7x:2x2x1
jax: 0.10.0
libtpu: 0.0.40
codegen_flags: <defaults>
</compile_context>

<pallas_src>
import functools

import jax
import jax.numpy as jnp
import numpy as np
from jax.experimental import pallas as pl
from jax.experimental.pallas import tpu as pltpu

# ----- module hyper-parameters (from __init__ defaults) ----------------------
GAMMA = 0.8
TAU_INIT = 0.07
TAU_MIN = 0.05
TAU_MAX = 1.0
RHO = 6.0
ETA_INIT = 0.03
BETA_U = 0.9
GRAD_CLIP = 3.0
ETA_SCHED = "const"            # forward uses eta_cur = ETA_INIT for 'const'

_PACK = 8                      # lane width of the packed state / result slabs
# result columns: [loss, grad_tau, s_new, u_new, tau_new, 0, 0, 0]
# state  columns: [s_old, tau_old, u_old, 0, ...]


# ----------------------------- kernel ----------------------------------------
def _sogclr_dro_kernel(logits_ref, pos_ref, state_ref, out_ref,
                       acc_g_ref, acc_r_ref, *, k_total):
    kk = pl.program_id(1)

    @pl.when(kk == 0)
    def _init():
        acc_g_ref[...] = jnp.zeros_like(acc_g_ref)
        acc_r_ref[...] = jnp.zeros_like(acc_r_ref)

    # TODO(synk): for bf16 HBM inputs a bf16 exp path (cast to f32 only for the
    # accumulations) roughly doubles EUP throughput on v6e/v7x, but it widens
    # the exp-overflow window; kept in f32 for parity with the torch reference.
    logits = logits_ref[...].astype(jnp.float32)          # (TB, TK)
    pos = pos_ref[...].astype(jnp.float32)                # (TB, 1) positive logit
    tau = state_ref[:, 1:2]                               # (TB, 1) old tau
    inv_tau = pl.reciprocal(tau, approx=False)            # exact; feeds the exp

    diff = logits - pos                                   # (TB, TK)
    e = jnp.exp(diff * inv_tau)                           # (TB, TK)
    # Only two K-wide reductions after the exp; `weights` never materialized.
    acc_g_ref[...] += jnp.sum(e, axis=1, keepdims=True)
    acc_r_ref[...] += jnp.sum(e * diff, axis=1, keepdims=True)

    @pl.when(kk == pl.num_programs(1) - 1)
    def _finalize():
        inv_k = jnp.float32(1.0 / k_total)
        s_old = state_ref[:, 0:1]
        u_old = state_ref[:, 2:3]

        g = acc_g_ref[...] * inv_k                        # mean(exp)
        r = acc_r_ref[...] * inv_k                        # mean(exp * diff)

        s_new = (1.0 - GAMMA) * s_old + GAMMA * g
        loss_row = r * pl.reciprocal(s_new, approx=False)  # mean(w * diff)

        # mean(weights * logits_diff_temp) == loss_row / tau (tau is per-row)
        grad_tau = jnp.log(s_new) + RHO - loss_row * inv_tau
        grad_tau = jnp.clip(grad_tau, -GRAD_CLIP, GRAD_CLIP)

        u_new = (1.0 - BETA_U) * u_old + BETA_U * grad_tau
        tau_new = jnp.clip(tau - ETA_INIT * u_new, TAU_MIN, TAU_MAX)

        tb = out_ref.shape[0]
        # Direct column writes (no nested-select chain) into one (TB, 8) slab.
        out_ref[:, 0:1] = loss_row
        out_ref[:, 1:2] = grad_tau
        out_ref[:, 2:3] = s_new
        out_ref[:, 3:4] = u_new
        out_ref[:, 4:5] = tau_new
        out_ref[:, 5:8] = jnp.zeros((tb, 3), jnp.float32)


# ----------------------------- tiling helpers --------------------------------
def _vmem_limit_bytes():
    """Per-generation VMEM limit with headroom for compiler-internal scratch."""
    try:
        cap = pltpu.get_tpu_info().vmem_capacity_bytes
    except Exception:
        cap = 64 * 1024 * 1024          # conservative (v7x physical VMEM)
    return int(max(min(cap - 16 * 1024 * 1024, 100 * 1024 * 1024),
                   32 * 1024 * 1024))


def _tile_candidates(n, base, cap):
    cands = [d for d in range(base, min(n, cap) + 1, base) if n % d == 0]
    if n <= cap:
        cands.append(n)                 # full-dim block is always legal
    if not cands:
        cands = [n]
    return sorted(set(cands), reverse=True)


def _pick_tiles(batch, k, in_itemsize, vmem_limit):
    """VMEM-aware (tb, tk): budget = double-buffered logits tile + ~3 f32
    (tb, tk) intermediates; prefer >= 4 B-grid steps (>= 2 per TC on v7x) and
    tiles big enough to amortize the ~0.35 us per-step overhead."""
    budget = vmem_limit // 2            # leave room for other streams / scratch
    tb_cands = _tile_candidates(batch, 8, 1024)
    tk_cands = _tile_candidates(k, 128, 1 << 30)

    def step_bytes(tb, tk):
        return tb * tk * (2 * in_itemsize + 3 * 4) + tb * 4 * 64

    best = None
    for tb in tb_cands:
        for tk in tk_cands:
            if step_bytes(tb, tk) > budget:
                continue
            score = (
                min(batch // tb, 4),                      # >=4 parallel steps
                min(tb * tk * in_itemsize, 4 << 20),      # amortize step cost
                tk,                                       # lane-long tiles
                tb,
            )
            if best is None or score > best[0]:
                best = (score, tb, tk)
    if best is None:
        return tb_cands[-1], tk_cands[-1]
    return best[1], best[2]


# ----------------------------- wrapper ----------------------------------------
@functools.partial(jax.jit, static_argnames=("tb", "tk"),
                   donate_argnums=(2, 3, 4))
def sogclr_dro_m_loss(index, logits, s_state, tau_state, u_state, *,
                      tb=None, tk=None):
    """Functional forward of SogCLR_DRO_M_Loss.

    Returns ((loss_mean, avg_tau, eta_cur, grad_tau_mean, 0.0),
             (s_state_new, tau_state_new, u_state_new)).
    State buffers are donated -> scatters update them in place.
    """
    B, K = logits.shape
    in_itemsize = jnp.dtype(logits.dtype).itemsize
    vmem_limit = _vmem_limit_bytes()
    if tb is None or tk is None:
        auto_tb, auto_tk = _pick_tiles(B, K, in_itemsize, vmem_limit)
        tb = auto_tb if tb is None else tb
        tk = auto_tk if tk is None else tk
    assert B % tb == 0 and K % tk == 0

    # --- gather per-row state; pack into ONE (B, 8) slab (one narrow DMA) ----
    # TODO(synk): move the size-N state gather/scatter fully in-kernel
    # (num_scalar_prefetch index in SMEM + pl.Element row maps + aliasing).
    tau_old = tau_state[index].astype(jnp.float32)           # (B,)
    gathered = jnp.stack(
        [s_state[index].astype(jnp.float32),
         tau_old,
         u_state[index].astype(jnp.float32)], axis=1)        # (B, 3)
    state_packed = jnp.pad(gathered, ((0, 0), (0, _PACK - 3)))   # (B, 8)
    pos = logits[:, 0:1]                                     # keep HBM dtype

    kernel = functools.partial(_sogclr_dro_kernel, k_total=K)
    cost = pl.CostEstimate(
        flops=6 * B * K,
        transcendentals=B * K,
        bytes_accessed=B * K * in_itemsize + B * (2 * _PACK * 4 + in_itemsize),
    )

    packed = pl.pallas_call(
        kernel,
        out_shape=jax.ShapeDtypeStruct((B, _PACK), jnp.float32),
        grid_spec=pltpu.PrefetchScalarGridSpec(
            num_scalar_prefetch=0,
            grid=(B // tb, K // tk),
            in_specs=[
                pl.BlockSpec((tb, tk), lambda i, k: (i, k)),     # logits tile
                pl.BlockSpec((tb, 1), lambda i, k: (i, 0)),      # positive logit
                pl.BlockSpec((tb, _PACK), lambda i, k: (i, 0)),  # packed s/tau/u
            ],
            out_specs=pl.BlockSpec((tb, _PACK), lambda i, k: (i, 0)),
            scratch_shapes=[pltpu.VMEM((tb, 1), jnp.float32),    # sum(exp)
                            pltpu.VMEM((tb, 1), jnp.float32)],   # sum(exp*diff)
        ),
        compiler_params=pltpu.CompilerParams(
            dimension_semantics=("parallel", "arbitrary"),
            vmem_limit_bytes=vmem_limit,
        ),
        cost_estimate=cost,
    )(logits, pos, state_packed)

    loss_row = packed[:, 0]
    grad_tau_row = packed[:, 1]
    s_new = packed[:, 2]
    u_new = packed[:, 3]
    tau_new = packed[:, 4]

    # --- scatter updated per-row state into the (donated, in-place) buffers ---
    s_state_new = s_state.at[index].set(s_new.astype(s_state.dtype))
    u_state_new = u_state.at[index].set(u_new.astype(u_state.dtype))
    tau_state_new = tau_state.at[index].set(tau_new.astype(tau_state.dtype))

    eta_cur = jnp.float32(ETA_INIT)                 # eta_sched == 'const'
    outs = (jnp.mean(loss_row), jnp.mean(tau_old), eta_cur,
            jnp.mean(grad_tau_row), jnp.float32(0.0))
    return outs, (s_state_new, tau_state_new, u_state_new)


# ----------------------------- pure-JAX reference ----------------------------
def _reference(index, logits, s_state, tau_state, u_state):
    """Pure-JAX port of the PyTorch forward (numerical check only)."""
    logits = logits.astype(jnp.float32)
    pos = logits[:, 0:1]
    tau = tau_state[index][:, None]
    diff = logits - pos
    diff_t = diff / tau
    e = jnp.exp(diff_t)
    g = jnp.mean(e, axis=1, keepdims=True)
    s_new = (1.0 - GAMMA) * s_state[index][:, None] + GAMMA * g
    w = e / s_new
    loss = jnp.mean(w * diff, axis=1, keepdims=True)
    grad_tau = jnp.log(s_new[:, 0]) + RHO - jnp.mean(w * diff_t, axis=1)
    grad_tau = jnp.clip(grad_tau, -GRAD_CLIP, GRAD_CLIP)
    u_new = (1.0 - BETA_U) * u_state[index] + BETA_U * grad_tau
    tau_new = jnp.clip(tau_state[index] - ETA_INIT * u_new, TAU_MIN, TAU_MAX)
    s_out = s_state.at[index].set(s_new[:, 0])
    u_out = u_state.at[index].set(u_new)
    tau_out = tau_state.at[index].set(tau_new)
    return ((loss.mean(), tau.mean(), jnp.float32(ETA_INIT),
             grad_tau.mean(), jnp.float32(0.0)),
            (s_out, tau_out, u_out))


if __name__ == "__main__":
    key = jax.random.PRNGKey(0)

    B, K = 64, 256          # batch rows, candidates (col 0 = positive logit)
    N = 4096                # small synthetic state size (module default 15e6)

    k_logits, k_idx = jax.random.split(key)
    logits = 0.1 * jax.random.normal(k_logits, (B, K), dtype=jnp.float32)
    index = jax.random.permutation(k_idx, N)[:B]     # unique row indices

    def fresh_state():
        return (jnp.zeros((N,), jnp.float32),
                jnp.ones((N,), jnp.float32) * TAU_INIT,
                jnp.zeros((N,), jnp.float32))

    # Reference first (kernel calls donate/invalidate their state buffers).
    s0, tau0, u0 = fresh_state()
    ref_outs, ref_state = jax.block_until_ready(
        _reference(index, logits, s0, tau0, u0))

    def check(outs, new_state):
        np.testing.assert_allclose(np.asarray(outs[0]), np.asarray(ref_outs[0]),
                                   rtol=2e-3, atol=1e-5)      # loss.mean()
        np.testing.assert_allclose(np.asarray(outs[1]), np.asarray(ref_outs[1]),
                                   rtol=2e-3, atol=1e-5)      # avg_tau (old)
        np.testing.assert_allclose(np.asarray(outs[3]), np.asarray(ref_outs[3]),
                                   rtol=2e-3, atol=1e-4)      # grad_tau.mean()
        for got, want in zip(new_state, ref_state):
            np.testing.assert_allclose(np.asarray(got), np.asarray(want),
                                       rtol=2e-3, atol=1e-5)

    # 1) auto-picked (VMEM-aware) tiles
    s1, tau1, u1 = fresh_state()
    outs, new_state = sogclr_dro_m_loss(index, logits, s1, tau1, u1)
    jax.block_until_ready((outs, new_state))
    check(outs, new_state)

    # 2) forced K-tiling to exercise the multi-step accumulator path
    s2, tau2, u2 = fresh_state()
    outs2, new_state2 = sogclr_dro_m_loss(index, logits, s2, tau2, u2,
                                          tb=32, tk=128)
    jax.block_until_ready((outs2, new_state2))
    check(outs2, new_state2)

    print("KERNEL_OK")
</pallas_src>

<mosaic_0001>
module attributes {stable_mosaic.version = 11 : i64} {
  func.func @_sogclr_dro_kernel(%arg0: i32, %arg1: i32, %arg2: memref<16x256xf32, #tpu.memory_space<vmem>>, %arg3: memref<16x1xf32, #tpu.memory_space<vmem>>, %arg4: memref<16x8xf32, #tpu.memory_space<vmem>>, %arg5: memref<16x8xf32, #tpu.memory_space<vmem>>, %arg6: memref<16x1xf32, #tpu.memory_space<vmem>>, %arg7: memref<16x1xf32, #tpu.memory_space<vmem>>) attributes {dimension_semantics = [#tpu.dimension_semantics<parallel>, #tpu.dimension_semantics<arbitrary>], iteration_bounds = array<i64: 4, 1>, scalar_prefetch = 0 : i64, scratch_operands = 2 : i64, tpu.core_type = #tpu.core_type<tc>, window_params = [{transform_indices = @transform_0, window_bounds = array<i64: 16, 256>}, {transform_indices = @transform_1, window_bounds = array<i64: 16, 1>}, {transform_indices = @transform_2, window_bounds = array<i64: 16, 8>}, {transform_indices = @transform_3, window_bounds = array<i64: 16, 8>}]} {
    %c0_i32 = arith.constant 0 : i32
    %0 = arith.cmpi eq, %arg1, %c0_i32 : i32
    %1 = arith.extui %0 : i1 to i32
    %c0_i32_0 = arith.constant 0 : i32
    %2 = arith.cmpi ne, %1, %c0_i32_0 : i32
    scf.if %2 {
      %cst_16 = arith.constant 0.000000e+00 : f32
      %26 = vector.broadcast %cst_16 : f32 to vector<16x1xf32>
      %c0_17 = arith.constant 0 : index
      %c0_18 = arith.constant 0 : index
      %27 = vector.load %arg6[%c0_17, %c0_18] : memref<16x1xf32, #tpu.memory_space<vmem>>, vector<16x1xf32>
      tpu.vector_store %arg6[%c0_17, %c0_18], %26 {strides = array<i32>} : memref<16x1xf32, #tpu.memory_space<vmem>>, vector<16x1xf32>,
      %cst_19 = arith.constant 0.000000e+00 : f32
      %28 = vector.broadcast %cst_19 : f32 to vector<16x1xf32>
      %c0_20 = arith.constant 0 : index
      %c0_21 = arith.constant 0 : index
      %29 = vector.load %arg7[%c0_20, %c0_21] : memref<16x1xf32, #tpu.memory_space<vmem>>, vector<16x1xf32>
      tpu.vector_store %arg7[%c0_20, %c0_21], %28 {strides = array<i32>} : memref<16x1xf32, #tpu.memory_space<vmem>>, vector<16x1xf32>,
    } else {
    }
    %c0 = arith.constant 0 : index
    %c0_1 = arith.constant 0 : index
    %3 = vector.load %arg2[%c0, %c0_1] : memref<16x256xf32, #tpu.memory_space<vmem>>, vector<16x256xf32>
    %c0_2 = arith.constant 0 : index
    %c0_3 = arith.constant 0 : index
    %4 = vector.load %arg3[%c0_2, %c0_3] : memref<16x1xf32, #tpu.memory_space<vmem>>, vector<16x1xf32>
    %c0_4 = arith.constant 0 : index
    %c1 = arith.constant 1 : index
    %5 = vector.load %arg4[%c0_4, %c1] : memref<16x8xf32, #tpu.memory_space<vmem>>, vector<16x1xf32>
    %6 = tpu.reciprocal %5 : vector<16x1xf32> -> vector<16x1xf32>
    %7 = vector.broadcast %4 : vector<16x1xf32> to vector<16x256xf32>
    %8 = arith.subf %3, %7 : vector<16x256xf32>
    %9 = vector.broadcast %6 : vector<16x1xf32> to vector<16x256xf32>
    %10 = arith.mulf %8, %9 : vector<16x256xf32>
    %11 = math.exp %10 : vector<16x256xf32>
    %c0_5 = arith.constant 0 : index
    %c0_6 = arith.constant 0 : index
    %12 = vector.load %arg6[%c0_5, %c0_6] : memref<16x1xf32, #tpu.memory_space<vmem>>, vector<16x1xf32>
    %cst = arith.constant dense<0.000000e+00> : vector<16xf32>
    %13 = vector.multi_reduction <add>, %11, %cst [1] : vector<16x256xf32> to vector<16xf32>
    %14 = vector.shape_cast %13 : vector<16xf32> to vector<16x1xf32>
    %15 = arith.addf %12, %14 : vector<16x1xf32>
    %c0_7 = arith.constant 0 : index
    %c0_8 = arith.constant 0 : index
    %16 = vector.load %arg6[%c0_7, %c0_8] : memref<16x1xf32, #tpu.memory_space<vmem>>, vector<16x1xf32>
    tpu.vector_store %arg6[%c0_7, %c0_8], %15 {strides = array<i32>} : memref<16x1xf32, #tpu.memory_space<vmem>>, vector<16x1xf32>,
    %c0_9 = arith.constant 0 : index
    %c0_10 = arith.constant 0 : index
    %17 = vector.load %arg7[%c0_9, %c0_10] : memref<16x1xf32, #tpu.memory_space<vmem>>, vector<16x1xf32>
    %18 = arith.mulf %11, %8 : vector<16x256xf32>
    %cst_11 = arith.constant dense<0.000000e+00> : vector<16xf32>
    %19 = vector.multi_reduction <add>, %18, %cst_11 [1] : vector<16x256xf32> to vector<16xf32>
    %20 = vector.shape_cast %19 : vector<16xf32> to vector<16x1xf32>
    %21 = arith.addf %17, %20 : vector<16x1xf32>
    %c0_12 = arith.constant 0 : index
    %c0_13 = arith.constant 0 : index
    %22 = vector.load %arg7[%c0_12, %c0_13] : memref<16x1xf32, #tpu.memory_space<vmem>>, vector<16x1xf32>
    tpu.vector_store %arg7[%c0_12, %c0_13], %21 {strides = array<i32>} : memref<16x1xf32, #tpu.memory_space<vmem>>, vector<16x1xf32>,
    %c0_i32_14 = arith.constant 0 : i32
    %23 = arith.cmpi eq, %arg1, %c0_i32_14 : i32
    %24 = arith.extui %23 : i1 to i32
    %c0_i32_15 = arith.constant 0 : i32
    %25 = arith.cmpi ne, %24, %c0_i32_15 : i32
    scf.if %25 {
      %c0_16 = arith.constant 0 : index
      %c0_17 = arith.constant 0 : index
      %26 = vector.load %arg4[%c0_16, %c0_17] : memref<16x8xf32, #tpu.memory_space<vmem>>, vector<16x1xf32>
      %c0_18 = arith.constant 0 : index
      %c2 = arith.constant 2 : index
      %27 = vector.load %arg4[%c0_18, %c2] : memref<16x8xf32, #tpu.memory_space<vmem>>, vector<16x1xf32>
      %c0_19 = arith.constant 0 : index
      %c0_20 = arith.constant 0 : index
      %28 = vector.load %arg6[%c0_19, %c0_20] : memref<16x1xf32, #tpu.memory_space<vmem>>, vector<16x1xf32>
      %cst_21 = arith.constant 3.906250e-03 : f32
      %29 = vector.broadcast %cst_21 : f32 to vector<16x1xf32>
      %30 = arith.mulf %28, %29 : vector<16x1xf32>
      %c0_22 = arith.constant 0 : index
      %c0_23 = arith.constant 0 : index
      %31 = vector.load %arg7[%c0_22, %c0_23] : memref<16x1xf32, #tpu.memory_space<vmem>>, vector<16x1xf32>
      %cst_24 = arith.constant 3.906250e-03 : f32
      %32 = vector.broadcast %cst_24 : f32 to vector<16x1xf32>
      %33 = arith.mulf %31, %32 : vector<16x1xf32>
      %cst_25 = arith.constant 2.000000e-01 : f32
      %34 = vector.broadcast %cst_25 : f32 to vector<16x1xf32>
      %35 = arith.mulf %34, %26 : vector<16x1xf32>
      %cst_26 = arith.constant 8.000000e-01 : f32
      %36 = vector.broadcast %cst_26 : f32 to vector<16x1xf32>
      %37 = arith.mulf %36, %30 : vector<16x1xf32>
      %38 = arith.addf %35, %37 : vector<16x1xf32>
      %39 = tpu.reciprocal %38 : vector<16x1xf32> -> vector<16x1xf32>
      %40 = arith.mulf %33, %39 : vector<16x1xf32>
      %41 = math.log %38 : vector<16x1xf32>
      %cst_27 = arith.constant 6.000000e+00 : f32
      %42 = vector.broadcast %cst_27 : f32 to vector<16x1xf32>
      %43 = arith.addf %41, %42 : vector<16x1xf32>
      %44 = arith.mulf %40, %6 : vector<16x1xf32>
      %45 = arith.subf %43, %44 : vector<16x1xf32>
      %cst_28 = arith.constant -3.000000e+00 : f32
      %cst_29 = arith.constant 3.000000e+00 : f32
      %46 = vector.broadcast %cst_28 : f32 to vector<16x1xf32>
      %47 = arith.maximumf %46, %45 : vector<16x1xf32>
      %48 = vector.broadcast %cst_29 : f32 to vector<16x1xf32>
      %49 = arith.minimumf %48, %47 : vector<16x1xf32>
      %cst_30 = arith.constant 1.000000e-01 : f32
      %50 = vector.broadcast %cst_30 : f32 to vector<16x1xf32>
      %51 = arith.mulf %50, %27 : vector<16x1xf32>
      %cst_31 = arith.constant 0.899999976 : f32
      %52 = vector.broadcast %cst_31 : f32 to vector<16x1xf32>
      %53 = arith.mulf %52, %49 : vector<16x1xf32>
      %54 = arith.addf %51, %53 : vector<16x1xf32>
      %cst_32 = arith.constant 3.000000e-02 : f32
      %55 = vector.broadcast %cst_32 : f32 to vector<16x1xf32>
      %56 = arith.mulf %55, %54 : vector<16x1xf32>
      %57 = arith.subf %5, %56 : vector<16x1xf32>
      %cst_33 = arith.constant 5.000000e-02 : f32
      %cst_34 = arith.constant 1.000000e+00 : f32
      %58 = vector.broadcast %cst_33 : f32 to vector<16x1xf32>
      %59 = arith.maximumf %58, %57 : vector<16x1xf32>
      %60 = vector.broadcast %cst_34 : f32 to vector<16x1xf32>
      %61 = arith.minimumf %60, %59 : vector<16x1xf32>
      %c0_35 = arith.constant 0 : index
      %c0_36 = arith.constant 0 : index
      %62 = vector.load %arg5[%c0_35, %c0_36] : memref<16x8xf32, #tpu.memory_space<vmem>>, vector<16x1xf32>
      tpu.vector_store %arg5[%c0_35, %c0_36], %40 {strides = array<i32>} : memref<16x8xf32, #tpu.memory_space<vmem>>, vector<16x1xf32>,
      %c0_37 = arith.constant 0 : index
      %c1_38 = arith.constant 1 : index
      %63 = vector.load %arg5[%c0_37, %c1_38] : memref<16x8xf32, #tpu.memory_space<vmem>>, vector<16x1xf32>
      tpu.vector_store %arg5[%c0_37, %c1_38], %49 {strides = array<i32>} : memref<16x8xf32, #tpu.memory_space<vmem>>, vector<16x1xf32>,
      %c0_39 = arith.constant 0 : index
      %c2_40 = arith.constant 2 : index
      %64 = vector.load %arg5[%c0_39, %c2_40] : memref<16x8xf32, #tpu.memory_space<vmem>>, vector<16x1xf32>
      tpu.vector_store %arg5[%c0_39, %c2_40], %38 {strides = array<i32>} : memref<16x8xf32, #tpu.memory_space<vmem>>, vector<16x1xf32>,
      %c0_41 = arith.constant 0 : index
      %c3 = arith.constant 3 : index
      %65 = vector.load %arg5[%c0_41, %c3] : memref<16x8xf32, #tpu.memory_space<vmem>>, vector<16x1xf32>
      tpu.vector_store %arg5[%c0_41, %c3], %54 {strides = array<i32>} : memref<16x8xf32, #tpu.memory_space<vmem>>, vector<16x1xf32>,
      %c0_42 = arith.constant 0 : index
      %c4 = arith.constant 4 : index
      %66 = vector.load %arg5[%c0_42, %c4] : memref<16x8xf32, #tpu.memory_space<vmem>>, vector<16x1xf32>
      tpu.vector_store %arg5[%c0_42, %c4], %61 {strides = array<i32>} : memref<16x8xf32, #tpu.memory_space<vmem>>, vector<16x1xf32>,
      %cst_43 = arith.constant 0.000000e+00 : f32
      %67 = vector.broadcast %cst_43 : f32 to vector<16x3xf32>
      %c0_44 = arith.constant 0 : index
      %c5 = arith.constant 5 : index
      %68 = vector.load %arg5[%c0_44, %c5] : memref<16x8xf32, #tpu.memory_space<vmem>>, vector<16x3xf32>
      tpu.vector_store %arg5[%c0_44, %c5], %67 {strides = array<i32>} : memref<16x8xf32, #tpu.memory_space<vmem>>, vector<16x3xf32>,
    } else {
    }
    return
  }
  func.func @transform_0(%arg0: i32, %arg1: i32) -> (i32, i32) {
    %c0_i32 = arith.constant 0 : i32
    return %arg0, %arg1 : i32, i32
  }
  func.func @transform_1(%arg0: i32, %arg1: i32) -> (i32, i32) {
    %c0_i32 = arith.constant 0 : i32
    %c0_i32_0 = arith.constant 0 : i32
    return %arg0, %c0_i32 : i32, i32
  }
  func.func @transform_2(%arg0: i32, %arg1: i32) -> (i32, i32) {
    %c0_i32 = arith.constant 0 : i32
    %c0_i32_0 = arith.constant 0 : i32
    return %arg0, %c0_i32 : i32, i32
  }
  func.func @transform_3(%arg0: i32, %arg1: i32) -> (i32, i32) {
    %c0_i32 = arith.constant 0 : i32
    %c0_i32_0 = arith.constant 0 : i32
    return %arg0, %c0_i32 : i32, i32
  }
}

</mosaic_0001>

<llo_original>
// kernel: sogclr_dro_m_loss.1
$region0: #{sogclr_dro_m_loss.1}
  #allocation0 [shape = 'u32[]', space=smem, size = 0x4, offset = 0x4, fixed_abs, tag = 'smem constant byte address 0x4 - core index']
  #allocation1 [shape = 'u32[144,128]{1,0:T(1,128)}', space=vmem, size = 0x12000, scoped, tag = 'internal scratch']
  #allocation2 [shape = 'f32[16,1]{1,0:T(8,128)}', space=vmem, size = 0x2000, scoped, tag = 'scratch operand']
  #allocation3 [shape = 'f32[16,1]{1,0:T(8,128)}', space=vmem, size = 0x2000, scoped, tag = 'scratch operand']
  %s0 = inlined_call_operand.vmem [shape: f32[64,256], index: 0, kind: input, shape index: {}]
  %s1 = inlined_call_operand.vmem [shape: f32[64,1], index: 1, kind: input, shape index: {}]
  %s2 = inlined_call_operand.vmem [shape: f32[64,8], index: 2, kind: input, shape index: {}]
  %s3 = inlined_call_operand.vmem [shape: f32[64,8], index: 3, kind: output, shape index: {}]
  %s4 = sld [smem:[#allocation0]]
  $region53: #{sogclr_dro_m_loss.1} parent=0
    _
  %s6 = ssub.s32 1, %s4
  %s7 = scalar_select 0, %s6, %s4
  loop: start=0, step=1, limit=6
  $region2: #{sogclr_dro_m_loss.1} parent=0 // loop_pre_header
    _
  $region3: #{sogclr_dro_m_loss.1} parent=0 // loop_header
    %s9 = sphi 0, %s13
    %p10 = scmp.ge.s32.totalorder %s9, 6
    %s16 = sphi 0, %s28
    %s17 = sphi 0, %s24
    %s18 = sphi 0, %s16
    %s19 = sphi 0, %s17
    %s20 = sphi 0, %s18
    %s21 = sphi 0, %s19
    %s33 = sphi 0, %s35
    %s36 = sphi 0, %s33
    %s37 = sphi 0, %s36
    %s53 = sphi 0, %s37
    %s59 = sphi 0, %s61
    %s62 = sphi 0, %s59
    %s63 = sphi 0, %s62
    %s79 = sphi 0, %s63
    %s85 = sphi 0, %s87
    %s88 = sphi 0, %s85
    %s89 = sphi 0, %s88
    %s105 = sphi 0, %s89
    %s111 = sphi 0, %s113
    %s114 = sphi 0, %s111
    %s115 = sphi 0, %s114
    %s131 = sphi 0, %s115
  $region4: #{sogclr_dro_m_loss.1} parent=0 // loop_header_branch
    %12 = sbr.rel (%p10) target = $region8
  $region5: #{sogclr_dro_m_loss.1} parent=0 // loop_body
    %s14 = ssub.s32 %s9, 1
    %s15 = ssub.s32 %s9, 2
    %s22 = sadd.s32 1, %s17
    %p23 = scmp.ge.s32.totalorder %s22, 1
    %s24 = scalar_select %p23, 0, %s22
    %s25 = sadd.s32 1, %s16
    %s26 = scalar_select %p23, %s25, %s16
    %p27 = scmp.ge.s32.totalorder %s26, 4
    %s28 = scalar_select %p27, 0, %s26
    %s29 = ssub.s32 %s16, %s28
    %s30 = ssub.s32 %s17, %s24
    %s31 = sor.u32 %s29, %s30
    %p32 = scmp.eq.s32.totalorder %s31, 0
    %s34 = sadd.s32 %s33, 1
    %s35 = scalar_select %p32, %s33, %s34
    %p38 = pneg %p32
    %p39 = scmp.eq.s32.totalorder %s9, 3
    %p40 = por %p38, %p39
    %p41 = scmp.ne.s32.totalorder %s33, %s36
    %p42 = scmp.eq.s32.totalorder %s9, 0
    %p43 = por %p41, %p42
    %p44 = scmp.ne.s32.totalorder %s33, %s36
    %p45 = scmp.eq.s32.totalorder %s14, 3
    %p46 = por %p44, %p45
    %p47 = scmp.ne.s32.totalorder %s36, %s37
    %p48 = scmp.eq.s32.totalorder %s14, 0
    %p49 = por %p47, %p48
    %p50 = scmp.ne.s32.totalorder %s36, %s37
    %p51 = scmp.eq.s32.totalorder %s15, 3
    %p52 = por %p50, %p51
    %p54 = scmp.ne.s32.totalorder %s37, %s53
    %p55 = scmp.eq.s32.totalorder %s15, 0
    %p56 = por %p54, %p55
    %s57 = ssub.s32 %s16, %s28
    %p58 = scmp.eq.s32.totalorder %s57, 0
    %s60 = sadd.s32 %s59, 1
    %s61 = scalar_select %p58, %s59, %s60
    %p64 = pneg %p58
    %p65 = scmp.eq.s32.totalorder %s9, 3
    %p66 = por %p64, %p65
    %p67 = scmp.ne.s32.totalorder %s59, %s62
    %p68 = scmp.eq.s32.totalorder %s9, 0
    %p69 = por %p67, %p68
    %p70 = scmp.ne.s32.totalorder %s59, %s62
    %p71 = scmp.eq.s32.totalorder %s14, 3
    %p72 = por %p70, %p71
    %p73 = scmp.ne.s32.totalorder %s62, %s63
    %p74 = scmp.eq.s32.totalorder %s14, 0
    %p75 = por %p73, %p74
    %p76 = scmp.ne.s32.totalorder %s62, %s63
    %p77 = scmp.eq.s32.totalorder %s15, 3
    %p78 = por %p76, %p77
    %p80 = scmp.ne.s32.totalorder %s63, %s79
    %p81 = scmp.eq.s32.totalorder %s15, 0
    %p82 = por %p80, %p81
    %s83 = ssub.s32 %s16, %s28
    %p84 = scmp.eq.s32.totalorder %s83, 0
    %s86 = sadd.s32 %s85, 1
    %s87 = scalar_select %p84, %s85, %s86
    %p90 = pneg %p84
    %p91 = scmp.eq.s32.totalorder %s9, 3
    %p92 = por %p90, %p91
    %p93 = scmp.ne.s32.totalorder %s85, %s88
    %p94 = scmp.eq.s32.totalorder %s9, 0
    %p95 = por %p93, %p94
    %p96 = scmp.ne.s32.totalorder %s85, %s88
    %p97 = scmp.eq.s32.totalorder %s14, 3
    %p98 = por %p96, %p97
    %p99 = scmp.ne.s32.totalorder %s88, %s89
    %p100 = scmp.eq.s32.totalorder %s14, 0
    %p101 = por %p99, %p100
    %p102 = scmp.ne.s32.totalorder %s88, %s89
    %p103 = scmp.eq.s32.totalorder %s15, 3
    %p104 = por %p102, %p103
    %p106 = scmp.ne.s32.totalorder %s89, %s105
    %p107 = scmp.eq.s32.totalorder %s15, 0
    %p108 = por %p106, %p107
    %s109 = ssub.s32 %s16, %s28
    %p110 = scmp.eq.s32.totalorder %s109, 0
    %s112 = sadd.s32 %s111, 1
    %s113 = scalar_select %p110, %s111, %s112
    %p116 = pneg %p110
    %p117 = scmp.eq.s32.totalorder %s9, 3
    %p118 = por %p116, %p117
    %p119 = scmp.ne.s32.totalorder %s111, %s114
    %p120 = scmp.eq.s32.totalorder %s9, 0
    %p121 = por %p119, %p120
    %p122 = scmp.ne.s32.totalorder %s111, %s114
    %p123 = scmp.eq.s32.totalorder %s14, 3
    %p124 = por %p122, %p123
    %p125 = scmp.ne.s32.totalorder %s114, %s115
    %p126 = scmp.eq.s32.totalorder %s14, 0
    %p127 = por %p125, %p126
    %p128 = scmp.ne.s32.totalorder %s114, %s115
    %p129 = scmp.eq.s32.totalorder %s15, 3
    %p130 = por %p128, %p129
    %p132 = scmp.ne.s32.totalorder %s115, %s131
    %p133 = scmp.eq.s32.totalorder %s15, 0
    %p134 = por %p132, %p133
    %p135 = scmp.le.s32.totalorder 1, %s9
    %p136 = scmp.lt.s32.totalorder %s9, 5
    %p137 = pnand %p135, %p136
    %p138 = pneg %p137
    // Predicated region
    $region9: #{sogclr_dro_m_loss.1} parent=5 // pred_check
      _
    $region10: #{sogclr_dro_m_loss.1} parent=5 // pred_check_branch
      %140 = sbr.rel (%p137) target = $region12
    $region11: #{sogclr_dro_m_loss.1} parent=5 // pred_region
      %s141 = ssub.s32 %s9, 1
    $region12: #{sogclr_dro_m_loss.1} parent=5 // pred_fallthru
      _
    %p142 = scmp.lt.s32.totalorder %s9, 4
    // Predicated region
    $region13: #{sogclr_dro_m_loss.1} parent=5 // pred_check
      %p143 = pneg %p142
    $region14: #{sogclr_dro_m_loss.1} parent=5 // pred_check_branch
      %145 = sbr.rel (%p143) target = $region16
    $region15: #{sogclr_dro_m_loss.1} parent=5 // pred_region
      // Predicated region
      $region17: #{sogclr_dro_m_loss.1} parent=15 // pred_check
        %p146 = pneg %p43
      $region18: #{sogclr_dro_m_loss.1} parent=15 // pred_check_branch
        %148 = sbr.rel (%p146) target = $region20
      $region19: #{sogclr_dro_m_loss.1} parent=15 // pred_region
        %s149 = smul.u32 2, %s16
        %s150 = smul.u32 2, %s17
        %p151 = scmp.lt.s32.totalorder %s149, 7
        %s152 = scalar_select %p151, %s149, 7
        %p153 = scmp.lt.s32.totalorder %s150, 1
        %s154 = scalar_select %p153, %s150, 1
        %s155 = smul.addr %s152, 2
        %s156 = sadd.s32 %s154, %s155
        %s157 = smul.addr %s156, 8
        %s158 = scalar_lea.vmem %s0, %s157
        %s159 = smul.u32 2, %s16
        %s160 = smul.u32 2, %s17
      $region20: #{sogclr_dro_m_loss.1} parent=15 // pred_fallthru
        _
      // Predicated region
      $region21: #{sogclr_dro_m_loss.1} parent=15 // pred_check
        %p161 = pneg %p69
      $region22: #{sogclr_dro_m_loss.1} parent=15 // pred_check_branch
        %163 = sbr.rel (%p161) target = $region24
      $region23: #{sogclr_dro_m_loss.1} parent=15 // pred_region
        %s164 = smul.u32 2, %s16
        %p165 = scmp.lt.s32.totalorder %s164, 7
        %s166 = scalar_select %p165, %s164, 7
        %s167 = smul.addr %s166, 8
        %s168 = scalar_lea.vmem %s1, %s167
        %s169 = smul.u32 2, %s16
      $region24: #{sogclr_dro_m_loss.1} parent=15 // pred_fallthru
        _
      // Predicated region
      $region25: #{sogclr_dro_m_loss.1} parent=15 // pred_check
        %p170 = pneg %p95
      $region26: #{sogclr_dro_m_loss.1} parent=15 // pred_check_branch
        %172 = sbr.rel (%p170) target = $region28
      $region27: #{sogclr_dro_m_loss.1} parent=15 // pred_region
        %s173 = smul.u32 2, %s16
        %p174 = scmp.lt.s32.totalorder %s173, 7
        %s175 = scalar_select %p174, %s173, 7
        %s176 = smul.addr %s175, 8
        %s177 = scalar_lea.vmem %s2, %s176
        %s178 = smul.u32 2, %s16
      $region28: #{sogclr_dro_m_loss.1} parent=15 // pred_fallthru
        _
    $region16: #{sogclr_dro_m_loss.1} parent=5 // pred_fallthru
      _
    %p179 = scmp.le.s32.totalorder 1, %s9
    %p180 = scmp.lt.s32.totalorder %s9, 5
    %p181 = pnand %p179, %p180
    %p182 = pneg %p181
    // Predicated region
    $region29: #{sogclr_dro_m_loss.1} parent=5 // pred_check
      _
    $region30: #{sogclr_dro_m_loss.1} parent=5 // pred_check_branch
      %184 = sbr.rel (%p181) target = $region32
    $region31: #{sogclr_dro_m_loss.1} parent=5 // pred_region
      %s185 = ssub.s32 %s9, 1
      %s186 = smul.u32 2, %s18
      %s187 = smul.u32 2, %s19
      %p188 = scmp.lt.s32.totalorder %s186, 7
      %s189 = scalar_select %p188, %s186, 7
      %p190 = scmp.lt.s32.totalorder %s187, 1
      %s191 = scalar_select %p190, %s187, 1
      %s192 = smul.addr %s189, 2
      %s193 = sadd.s32 %s191, %s192
      %s194 = smul.addr %s193, 8
      %s195 = scalar_lea.vmem %s0, %s194
      %p196 = pneg %p49
      %p197 = pneg %p46
      %s198 = smul.u32 2, %s18
      %p199 = scmp.lt.s32.totalorder %s198, 7
      %s200 = scalar_select %p199, %s198, 7
      %s201 = smul.addr %s200, 8
      %s202 = scalar_lea.vmem %s1, %s201
      %p203 = pneg %p75
      %p204 = pneg %p72
      %s205 = smul.u32 2, %s18
      %p206 = scmp.lt.s32.totalorder %s205, 7
      %s207 = scalar_select %p206, %s205, 7
      %s208 = smul.addr %s207, 8
      %s209 = scalar_lea.vmem %s2, %s208
      %p210 = pneg %p101
      %p211 = pneg %p98
      %p212 = pneg %p127
      %p213 = pneg %p124
      %s214 = smul.u32 2, %s18
      %p215 = scmp.lt.s32.totalorder %s214, 7
      %s216 = scalar_select %p215, %s214, 7
      %s217 = smul.addr %s216, 8
      %s218 = scalar_lea.vmem %s3, %s217
      %s219 = smul.u32 2, %s18
      %s220 = smul.u32 2, %s19
      %p221 = scmp.lt.s32.totalorder %s219, 7
      %s222 = scalar_select %p221, %s219, 7
      %p223 = scmp.lt.s32.totalorder %s220, 1
      %s224 = scalar_select %p223, %s220, 1
      %s225 = smul.addr %s222, 2
      %s226 = sadd.s32 %s224, %s225
      %s227 = smul.addr %s226, 8
      %s228 = scalar_lea.vmem %s0, %s227
      %s229 = smul.u32 2, %s18
      %s230 = smul.u32 2, %s19
      %s231 = smul.u32 2, %s18
      %p232 = scmp.lt.s32.totalorder %s231, 7
      %s233 = scalar_select %p232, %s231, 7
      %s234 = smul.addr %s233, 8
      %s235 = scalar_lea.vmem %s1, %s234
      %s236 = smul.u32 2, %s18
      %s237 = smul.u32 2, %s18
      %p238 = scmp.lt.s32.totalorder %s237, 7
      %s239 = scalar_select %p238, %s237, 7
      %s240 = smul.addr %s239, 8
      %s241 = scalar_lea.vmem %s2, %s240
      %s242 = smul.u32 2, %s18
      %s243 = smul.u32 2, %s18
      %p244 = scmp.lt.s32.totalorder %s243, 7
      %s245 = scalar_select %p244, %s243, 7
      %s246 = smul.addr %s245, 8
      %s247 = scalar_lea.vmem %s3, %s246
      %s248 = smul.u32 2, %s18
      %p249 = scmp.eq.s32.totalorder %s19, 0
      // Predicated region
      $region33: #{sogclr_dro_m_loss.1} parent=31 // pred_check
        %p250 = pneg %p249
      $region34: #{sogclr_dro_m_loss.1} parent=31 // pred_check_branch
        %252 = sbr.rel (%p250) target = $region36
      $region35: #{sogclr_dro_m_loss.1} parent=31 // pred_region
        %vm253 = vcmask 7168
        %254 = vst.msk [vmem:[#allocation2] sm:$0xff] %vm253, 0.0
        %255 = vst.msk [vmem:[#allocation2 + $0x8] sm:$0xff] %vm253, 0.0
        %256 = vst.msk [vmem:[#allocation3] sm:$0xff] %vm253, 0.0
        %257 = vst.msk [vmem:[#allocation3 + $0x8] sm:$0xff] %vm253, 0.0
      $region36: #{sogclr_dro_m_loss.1} parent=31 // pred_fallthru
        _
      %v258 = vld [vmem:[%s228] sm:$0xff]
      %v259 = vld [vmem:[%s228 + $0x8] sm:$0xff]
      %v260 = vld [vmem:[%s228 + $0x10] sm:$0xff]
      %v261 = vld [vmem:[%s228 + $0x18] sm:$0xff]
      %v262 = vld [vmem:[%s235] sm:$0xff]
      %v263 = vld [vmem:[%s235 + $0x8] sm:$0xff]
      %v264 = vld [vmem:[%s241] sm:$0xff]
      %v265 = vld [vmem:[%s241 + $0x8] sm:$0xff]
      %v266 = vrcp.pop %v264
      %v267 = vrcp.pop %v265
      %269 = vset.pattern.permute.xlu0 0
      %270 = vperm.xlu0 %269, %v262
      %v271 = vpop.permute.xlu0 %270
      %274 = vset.pattern.permute.xlu0 0
      %275 = vperm.xlu0 %274, %v263
      %v276 = vpop.permute.xlu0 %275
      %v278 = vsub.f32 %v258, %v271
      %v279 = vsub.f32 %v259, %v271
      %v280 = vsub.f32 %v260, %v276
      %v281 = vsub.f32 %v261, %v276
      %283 = vset.pattern.permute.xlu0 1
      %284 = vperm.xlu0 %283, %v266
      %v285 = vpop.permute.xlu0 %284
      %288 = vset.pattern.permute.xlu0 1
      %289 = vperm.xlu0 %288, %v267
      %v290 = vpop.permute.xlu0 %289
      %v292 = vmul.f32 %v278, %v285
      %v293 = vmul.f32 %v279, %v285
      %v294 = vmul.f32 %v280, %v290
      %v295 = vmul.f32 %v281, %v290
      %v296 = vmul.f32 %v292, 1.442695
      %v297 = vpow.pop %v296
      %v298 = vmul.f32 %v293, 1.442695
      %v299 = vpow.pop %v298
      %v300 = vmul.f32 %v294, 1.442695
      %v301 = vpow.pop %v300
      %v302 = vmul.f32 %v295, 1.442695
      %v303 = vpow.pop %v302
      %v304 = vld [vmem:[#allocation2] sm:$0xff]
      %v305 = vld [vmem:[#allocation2 + $0x8] sm:$0xff]
      %v306 = vadd.f32 %v297, %v299
      %307 = vadd.xlane.f32.xlu0 %v306
      %v308 = vpop.xlane.xlu0 %307
      %v309 = vadd.f32 %v301, %v303
      %310 = vadd.xlane.f32.xlu0 %v309
      %v311 = vpop.xlane.xlu0 %310
      %v312 = vadd.f32 %v304, %v308
      %v313 = vadd.f32 %v305, %v311
      %vm314 = vcmask 7168
      %315 = vst.msk [vmem:[#allocation2] sm:$0xff] %vm314, %v312
      %316 = vst.msk [vmem:[#allocation2 + $0x8] sm:$0xff] %vm314, %v313
      %v317 = vld [vmem:[#allocation3] sm:$0xff]
      %v318 = vld [vmem:[#allocation3 + $0x8] sm:$0xff]
      %v319 = vmul.f32 %v297, %v278
      %v320 = vmul.f32 %v299, %v279
      %v321 = vmul.f32 %v301, %v280
      %v322 = vmul.f32 %v303, %v281
      %v323 = vadd.f32 %v319, %v320
      %324 = vadd.xlane.f32.xlu0 %v323
      %v325 = vpop.xlane.xlu0 %324
      %v326 = vadd.f32 %v321, %v322
      %327 = vadd.xlane.f32.xlu0 %v326
      %v328 = vpop.xlane.xlu0 %327
      %v329 = vadd.f32 %v317, %v325
      %v330 = vadd.f32 %v318, %v328
      %331 = vst.msk [vmem:[#allocation3] sm:$0xff] %vm314, %v329
      %332 = vst.msk [vmem:[#allocation3 + $0x8] sm:$0xff] %vm314, %v330
      // Predicated region
      $region37: #{sogclr_dro_m_loss.1} parent=31 // pred_check
        %p333 = pneg %p249
      $region38: #{sogclr_dro_m_loss.1} parent=31 // pred_check_branch
        %335 = sbr.rel (%p333) target = $region40
      $region39: #{sogclr_dro_m_loss.1} parent=31 // pred_region
        %v336 = vld [vmem:[%s241] sm:$0xff]
        %v337 = vld [vmem:[%s241 + $0x8] sm:$0xff]
        %v338 = vld [vmem:[#allocation2] sm:$0xff]
        %v339 = vld [vmem:[#allocation2 + $0x8] sm:$0xff]
        %v340 = vmul.f32 %v338, 0.00390625
        %v341 = vmul.f32 %v339, 0.00390625
        %v342 = vld [vmem:[#allocation3] sm:$0xff]
        %v343 = vld [vmem:[#allocation3 + $0x8] sm:$0xff]
        %v344 = vmul.f32 %v342, 0.00390625
        %v345 = vmul.f32 %v343, 0.00390625
        %v346 = vmul.f32 %v336, 0.2
        %v347 = vmul.f32 %v337, 0.2
        %v348 = vmul.f32 %v340, 0.8
        %v349 = vmul.f32 %v341, 0.8
        %v350 = vadd.f32 %v346, %v348
        %v351 = vadd.f32 %v347, %v349
        %v352 = vrcp.pop %v350
        %v353 = vrcp.pop %v351
        %v354 = vmul.f32 %v344, %v352
        %v355 = vmul.f32 %v345, %v353
        %v356 = vlog2.pop %v350
        %v357 = vmul.f32 %v356, 0.6931472
        %v358 = vlog2.pop %v351
        %v359 = vmul.f32 %v358, 0.6931472
        %v360 = vadd.f32 %v357, 6.0
        %v361 = vadd.f32 %v359, 6.0
        %362 = vrot.lane.b32.xlu0 %v266, 127
        %v363 = vpop.permute.xlu0 %362
        %364 = vrot.lane.b32.xlu0 %v267, 127
        %v365 = vpop.permute.xlu0 %364
        %v368 = vmul.f32 %v354, %v363
        %v369 = vmul.f32 %v355, %v365
        %v370 = vsub.f32 %v360, %v368
        %v371 = vsub.f32 %v361, %v369
        %v372 = vmax.f32 %v370, -3.0
        %v373 = vmax.f32 %v371, -3.0
        %v374 = vmin.f32 %v372, 3.0
        %v375 = vmin.f32 %v373, 3.0
        %v376 = vmul.f32 %v336, 0.1
        %v377 = vmul.f32 %v337, 0.1
        %v378 = vmul.f32 %v374, 0.9
        %v379 = vmul.f32 %v375, 0.9
        %382 = vrot.lane.b32.xlu0 %v378, 2
        %v383 = vpop.permute.xlu0 %382
        %384 = vrot.lane.b32.xlu0 %v379, 2
        %v385 = vpop.permute.xlu0 %384
        %v388 = vadd.f32 %v376, %v383
        %v389 = vadd.f32 %v377, %v385
        %v390 = vmul.f32 %v388, 0.03
        %v391 = vmul.f32 %v389, 0.03
        %394 = vrot.lane.b32.xlu0 %v390, 127
        %v395 = vpop.permute.xlu0 %394
        %396 = vrot.lane.b32.xlu0 %v391, 127
        %v397 = vpop.permute.xlu0 %396
        %v400 = vsub.f32 %v264, %v395
        %v401 = vsub.f32 %v265, %v397
        %v402 = vmax.f32 %v400, 0.05
        %v403 = vmax.f32 %v401, 0.05
        %v404 = vmin.f32 %v402, 1.0
        %v405 = vmin.f32 %v403, 1.0
        %406 = vst.msk [vmem:[%s247] sm:$0xff] %vm314, %v354
        %407 = vst.msk [vmem:[%s247 + $0x8] sm:$0xff] %vm314, %v355
        %410 = vrot.lane.b32.xlu0 %v374, 1
        %v411 = vpop.permute.xlu0 %410
        %412 = vrot.lane.b32.xlu0 %v375, 1
        %v413 = vpop.permute.xlu0 %412
        %vm416 = vcmask 15368
        %417 = vst.msk [vmem:[%s247] sm:$0xff] %vm416, %v411
        %418 = vst.msk [vmem:[%s247 + $0x8] sm:$0xff] %vm416, %v413
        %421 = vrot.lane.b32.xlu0 %v350, 2
        %v422 = vpop.permute.xlu0 %421
        %423 = vrot.lane.b32.xlu0 %v351, 2
        %v424 = vpop.permute.xlu0 %423
        %vm427 = vcmask 23568
        %428 = vst.msk [vmem:[%s247] sm:$0xff] %vm427, %v422
        %429 = vst.msk [vmem:[%s247 + $0x8] sm:$0xff] %vm427, %v424
        %432 = vrot.lane.b32.xlu0 %v388, 1
        %v433 = vpop.permute.xlu0 %432
        %434 = vrot.lane.b32.xlu0 %v389, 1
        %v435 = vpop.permute.xlu0 %434
        %vm438 = vcmask 31768
        %439 = vst.msk [vmem:[%s247] sm:$0xff] %vm438, %v433
        %440 = vst.msk [vmem:[%s247 + $0x8] sm:$0xff] %vm438, %v435
        %443 = vrot.lane.b32.xlu0 %v404, 3
        %v444 = vpop.permute.xlu0 %443
        %445 = vrot.lane.b32.xlu0 %v405, 3
        %v446 = vpop.permute.xlu0 %445
        %vm449 = vcmask 39968
        %450 = vst.msk [vmem:[%s247] sm:$0xff] %vm449, %v444
        %451 = vst.msk [vmem:[%s247 + $0x8] sm:$0xff] %vm449, %v446
        %vm452 = vcmask 64552
        %453 = vst.msk [vmem:[%s247] sm:$0xff] %vm452, 0.0
        %454 = vst.msk [vmem:[%s247 + $0x8] sm:$0xff] %vm452, 0.0
      $region40: #{sogclr_dro_m_loss.1} parent=31 // pred_fallthru
        _
      %s455 = smul.u32 2, %s18
      %p456 = scmp.lt.s32.totalorder %s455, 7
      %s457 = scalar_select %p456, %s455, 7
      %s458 = smul.addr %s457, 8
      %s459 = scalar_lea.vmem %s3, %s458
      // Predicated region
      $region41: #{sogclr_dro_m_loss.1} parent=31 // pred_check
        %p460 = pneg %p124
      $region42: #{sogclr_dro_m_loss.1} parent=31 // pred_check_branch
        %462 = sbr.rel (%p460) target = $region44
      $region43: #{sogclr_dro_m_loss.1} parent=31 // pred_region
        %s463 = smul.u32 2, %s18
      $region44: #{sogclr_dro_m_loss.1} parent=31 // pred_fallthru
        _
    $region32: #{sogclr_dro_m_loss.1} parent=5 // pred_fallthru
      _
    %p464 = scmp.le.s32.totalorder 2, %s9
    // Predicated region
    $region45: #{sogclr_dro_m_loss.1} parent=5 // pred_check
      %p465 = pneg %p464
    $region46: #{sogclr_dro_m_loss.1} parent=5 // pred_check_branch
      %467 = sbr.rel (%p465) target = $region48
    $region47: #{sogclr_dro_m_loss.1} parent=5 // pred_region
      %s468 = ssub.s32 %s9, 2
      // Predicated region
      $region49: #{sogclr_dro_m_loss.1} parent=47 // pred_check
        %p469 = pneg %p130
      $region50: #{sogclr_dro_m_loss.1} parent=47 // pred_check_branch
        %471 = sbr.rel (%p469) target = $region52
      $region51: #{sogclr_dro_m_loss.1} parent=47 // pred_region
        %s472 = smul.u32 2, %s20
        %p473 = scmp.lt.s32.totalorder %s472, 7
        %s474 = scalar_select %p473, %s472, 7
        %s475 = smul.addr %s474, 8
        %s476 = scalar_lea.vmem %s3, %s475
      $region52: #{sogclr_dro_m_loss.1} parent=47 // pred_fallthru
        _
    $region48: #{sogclr_dro_m_loss.1} parent=5 // pred_fallthru
      _
  $region6: #{sogclr_dro_m_loss.1} parent=0 // loop_footer
    %s13 = sadd.s32 1, %s9
  $region7: #{sogclr_dro_m_loss.1} parent=0 // loop_footer_branch
    %8 = sbr.rel target = $region3
  $region8: #{sogclr_dro_m_loss.1} parent=0 // loop_exit
    _

</llo_original>
